<compile_context>
chip_gen: v6e
topology: v6e:2x2x1
jax: 0.10.0
libtpu: 0.0.40
codegen_flags: <defaults>
</compile_context>

<pallas_src>
import jax
import jax.numpy as jnp
from jax.experimental import pallas as pl
from jax.experimental.pallas import tpu as pltpu


def _round_up(x, m):
    return (x + m - 1) // m * m


def _make_kernel(tile_q, n_psg, hidden_pad):
    """Fused scorer + per-query CE kernel, specialized on static shapes."""
    P, Hp = n_psg, hidden_pad

    def kernel(x_ref,        # VMEM (tile_q, P*Hp)  bf16   (per-query packed passages)
               w1_ref,       # VMEM (Hp, D)         bf16   (resident)
               b1_ref,       # VMEM (1, D)          f32
               w2_ref,       # VMEM (1, D)          f32    (lane-dense output row)
               b2_ref,       # VMEM (1, 1)          f32
               labels_ref,   # VMEM (tile_q, 1)     int32
               logits_ref,   # out  (tile_q, P)     f32
               nll_ref):     # out  (tile_q, 1)     f32    (per-query NLL partials)
        lane = jax.lax.broadcasted_iota(jnp.int32, (1, P), 1)

        # ---- synthetic hf_model scorer ------------------------------------
        # One lane-aligned (tile_q, Hp) slice per passage; bf16 MXU matmul with f32
        # accumulation, all elementwise math in f32 (v5e has no bf16 VPU/EUP).
        logits = jnp.zeros((tile_q, P), jnp.float32)
        for p in range(P):                                   # static tiny loop (P ~ 4-8)
            xp = x_ref[:, p * Hp:(p + 1) * Hp]               # (tile_q, Hp) bf16, aligned
            hp = jnp.dot(xp, w1_ref[...],
                         preferred_element_type=jnp.float32)  # f32 accumulate
            hp = jnp.tanh(hp + b1_ref[...])                   # f32 EUP
            # output layer: VPU mul + lane reduce (no N=1 MXU matmul)
            col = jnp.sum(hp * w2_ref[...], axis=-1, keepdims=True) + b2_ref[...]
            logits = logits + col * (lane == p).astype(jnp.float32)
        logits_ref[...] = logits

        # ---- vectorized per-query cross-entropy (log-softmax + NLL) --------
        m = jnp.max(logits, axis=-1, keepdims=True)
        lse = m + jnp.log(jnp.sum(jnp.exp(logits - m), axis=-1, keepdims=True))
        onehot = (lane == labels_ref[...]).astype(jnp.float32)        # (tile_q, P)
        picked = jnp.sum(logits * onehot, axis=-1, keepdims=True)     # (tile_q, 1)
        nll_ref[...] = lse - picked

    return kernel


def reranker_forward(x, params, labels, n_psg_per_query, *, tile_q=None,
                     vmem_budget_bytes=None):
    """Standard path of Reranker.forward (factor == 1, no R-Drop).

    Returns (logits[(Q, P)], scalar mean CE loss).
    """
    w1, b1, w2_row, b2 = params
    B, H = x.shape
    P = int(n_psg_per_query)
    Q = B // P
    assert Q * P == B, "batch must be num_queries * n_psg_per_query"
    D = w1.shape[1]

    # --- host-side layout prep ---------------------------------------------
    # Pad hidden dim to a lane multiple so per-passage x slices are vreg-aligned.
    Hp = _round_up(H, 128)
    if Hp != H:
        x = jnp.pad(x, ((0, 0), (0, Hp - H)))
        w1 = jnp.pad(w1, ((0, Hp - H), (0, 0)))

    # bf16 MXU operands; x reshaped (free, row-major) so each grid row packs all P
    # passages of one query.
    x_bf = x.astype(jnp.bfloat16).reshape(Q, P * Hp)
    w1_bf = w1.astype(jnp.bfloat16)
    b1_f = jnp.asarray(b1, jnp.float32).reshape(1, D)
    w2_f = jnp.asarray(w2_row, jnp.float32).reshape(1, D)
    b2_f = jnp.asarray(b2, jnp.float32).reshape(1, 1)
    labels_col = labels.astype(jnp.int32).reshape(Q, 1)

    # --- tile selection (per-generation VMEM budget) ------------------------
    if vmem_budget_bytes is None:
        try:
            phys_vmem = pltpu.get_tpu_info().vmem_capacity_bytes
        except Exception:
            phys_vmem = 64 * 2**20            # conservative (v7x-sized)
        vmem_budget_bytes = min(phys_vmem // 3, 32 * 2**20)

    x_row_bytes = P * Hp * 2                  # bf16
    if tile_q is None:
        max_rows = max(1, vmem_budget_bytes // (3 * x_row_bytes))   # 3 x-buffers
        if Q <= max_rows:
            tile_q = Q
        else:
            tile_q = None
            for t in range(8, Q, 8):          # multiple-of-8 divisors of Q
                if Q % t == 0 and t <= max_rows:
                    tile_q = t
            if tile_q is None:
                tile_q = Q                    # fall back: single tile
    assert Q % tile_q == 0, "tile_q must divide num_queries"
    num_tiles = Q // tile_q

    vmem_limit_bytes = int(min(int(1.5 * vmem_budget_bytes) + (8 << 20), 48 << 20))

    # --- pallas_call ---------------------------------------------------------
    kernel = _make_kernel(tile_q, P, Hp)

    x_spec_kwargs = {}
    if num_tiles >= 3:
        # compute per tile is tiny -> keep the DMA engine continuously busy
        x_spec_kwargs["pipeline_mode"] = pl.Buffered(3)

    grid_spec = pltpu.PrefetchScalarGridSpec(
        num_scalar_prefetch=0,
        grid=(num_tiles,),
        in_specs=[
            pl.BlockSpec((tile_q, P * Hp), lambda qt: (qt, 0), **x_spec_kwargs),  # x
            pl.BlockSpec((Hp, D), lambda qt: (0, 0)),      # w1 (resident)
            pl.BlockSpec((1, D), lambda qt: (0, 0)),       # b1
            pl.BlockSpec((1, D), lambda qt: (0, 0)),       # w2 row
            pl.BlockSpec((1, 1), lambda qt: (0, 0)),       # b2
            pl.BlockSpec((tile_q, 1), lambda qt: (qt, 0)),  # labels
        ],
        out_specs=[
            pl.BlockSpec((tile_q, P), lambda qt: (qt, 0)),  # logits
            pl.BlockSpec((tile_q, 1), lambda qt: (qt, 0)),  # per-query NLL
        ],
    )

    logits, nll = pl.pallas_call(
        kernel,
        out_shape=(jax.ShapeDtypeStruct((Q, P), jnp.float32),
                   jax.ShapeDtypeStruct((Q, 1), jnp.float32)),
        grid_spec=grid_spec,
        compiler_params=pltpu.CompilerParams(
            # tiles write disjoint blocks -> safe to shard across TensorCores (v7x)
            dimension_semantics=("parallel",),
            vmem_limit_bytes=vmem_limit_bytes),
    )(x_bf, w1_bf, b1_f, w2_f, b2_f, labels_col)

    loss = jnp.mean(nll)   # mean-reduced CE over queries (tiny, plain XLA)
    return logits, loss


if __name__ == "__main__":
    # Small shapes implied by the module:
    #   train_n_passages = 4, rerank_forward_factor = 1 -> n_psg_per_query = 4
    #   num_queries = 2, hidden = 32, scorer intermediate dim = 16
    Q, P, H, D = 2, 4, 32, 16
    B = Q * P

    key = jax.random.PRNGKey(0)
    kx, k1, k2, k3, k4 = jax.random.split(key, 5)
    x = jax.random.normal(kx, (B, H), dtype=jnp.float32)
    w1 = jax.random.normal(k1, (H, D), dtype=jnp.float32) * 0.1
    b1 = jax.random.normal(k2, (1, D), dtype=jnp.float32) * 0.1
    w2 = jax.random.normal(k3, (1, D), dtype=jnp.float32) * 0.1   # lane-dense row
    b2 = jax.random.normal(k4, (1, 1), dtype=jnp.float32) * 0.1
    labels = jnp.zeros((Q,), dtype=jnp.int32)   # positive passage is index 0

    logits, loss = reranker_forward(x, (w1, b1, w2, b2), labels, P)
    jax.block_until_ready((logits, loss))

    # Pure-JAX reference with the same bf16-rounded MXU operands / f32 math.
    xb = x.astype(jnp.bfloat16).astype(jnp.float32)
    w1b = w1.astype(jnp.bfloat16).astype(jnp.float32)
    h_ref = jnp.tanh(jnp.dot(xb, w1b, precision=jax.lax.Precision.HIGHEST) + b1)
    flat_ref = jnp.sum(h_ref * w2, axis=-1) + b2[0, 0]
    logits_ref = flat_ref.reshape(Q, P)
    logprob_ref = jax.nn.log_softmax(logits_ref, axis=-1)
    loss_ref = -jnp.mean(logprob_ref[jnp.arange(Q), labels])

    assert jnp.allclose(logits, logits_ref, atol=1e-4), "logits mismatch"
    assert jnp.allclose(loss, loss_ref, atol=1e-4), "loss mismatch"

    print("KERNEL_OK")
</pallas_src>

<mosaic_0001>
module attributes {stable_mosaic.version = 11 : i64} {
  func.func @kernel(%arg0: i32, %arg1: memref<2x512xbf16, #tpu.memory_space<vmem>>, %arg2: memref<128x16xbf16, #tpu.memory_space<vmem>>, %arg3: memref<1x16xf32, #tpu.memory_space<vmem>>, %arg4: memref<1x16xf32, #tpu.memory_space<vmem>>, %arg5: memref<1x1xf32, #tpu.memory_space<vmem>>, %arg6: memref<2x1xi32, #tpu.memory_space<vmem>>, %arg7: memref<2x4xf32, #tpu.memory_space<vmem>>, %arg8: memref<2x1xf32, #tpu.memory_space<vmem>>) attributes {dimension_semantics = [#tpu.dimension_semantics<parallel>], iteration_bounds = array<i64: 1>, scalar_prefetch = 0 : i64, scratch_operands = 0 : i64, tpu.core_type = #tpu.core_type<tc>, window_params = [{transform_indices = @transform_0, window_bounds = array<i64: 2, 512>}, {pipeline_mode = #tpu.pipeline_mode<synchronous>, transform_indices = @transform_1, window_bounds = array<i64: 128, 16>}, {pipeline_mode = #tpu.pipeline_mode<synchronous>, transform_indices = @transform_2, window_bounds = array<i64: 1, 16>}, {pipeline_mode = #tpu.pipeline_mode<synchronous>, transform_indices = @transform_3, window_bounds = array<i64: 1, 16>}, {pipeline_mode = #tpu.pipeline_mode<synchronous>, transform_indices = @transform_4, window_bounds = array<i64: 1, 1>}, {transform_indices = @transform_5, window_bounds = array<i64: 2, 1>}, {transform_indices = @transform_6, window_bounds = array<i64: 2, 4>}, {transform_indices = @transform_7, window_bounds = array<i64: 2, 1>}]} {
    %0 = tpu.iota {dimensions = array<i32: 1>} : vector<1x4xi32>
    %cst = arith.constant 0.000000e+00 : f32
    %1 = vector.broadcast %cst : f32 to vector<2x4xf32>
    %c0 = arith.constant 0 : index
    %c0_0 = arith.constant 0 : index
    %2 = vector.load %arg1[%c0, %c0_0] : memref<2x512xbf16, #tpu.memory_space<vmem>>, vector<2x128xbf16>
    %c0_1 = arith.constant 0 : index
    %c0_2 = arith.constant 0 : index
    %3 = vector.load %arg2[%c0_1, %c0_2] : memref<128x16xbf16, #tpu.memory_space<vmem>>, vector<128x16xbf16>
    %cst_3 = arith.constant dense<0.000000e+00> : vector<2x16xf32>
    %4 = tpu.matmul %2, %3, %cst_3 {dimension_numbers = #tpu.dot_dimension_numbers<[1], [0], [0], [1], [0, 0, 1, 1], [], []>} : vector<2x128xbf16>, vector<128x16xbf16>, vector<2x16xf32> -> vector<2x16xf32>
    %c0_4 = arith.constant 0 : index
    %c0_5 = arith.constant 0 : index
    %5 = vector.load %arg3[%c0_4, %c0_5] : memref<1x16xf32, #tpu.memory_space<vmem>>, vector<1x16xf32>
    %6 = vector.broadcast %5 : vector<1x16xf32> to vector<2x16xf32>
    %7 = arith.addf %4, %6 : vector<2x16xf32>
    %8 = math.tanh %7 : vector<2x16xf32>
    %c0_6 = arith.constant 0 : index
    %c0_7 = arith.constant 0 : index
    %9 = vector.load %arg4[%c0_6, %c0_7] : memref<1x16xf32, #tpu.memory_space<vmem>>, vector<1x16xf32>
    %10 = vector.broadcast %9 : vector<1x16xf32> to vector<2x16xf32>
    %11 = arith.mulf %8, %10 : vector<2x16xf32>
    %cst_8 = arith.constant dense<0.000000e+00> : vector<2xf32>
    %12 = vector.multi_reduction <add>, %11, %cst_8 [1] : vector<2x16xf32> to vector<2xf32>
    %13 = vector.shape_cast %12 : vector<2xf32> to vector<2x1xf32>
    %c0_9 = arith.constant 0 : index
    %c0_10 = arith.constant 0 : index
    %14 = vector.load %arg5[%c0_9, %c0_10] : memref<1x1xf32, #tpu.memory_space<vmem>>, vector<1x1xf32>
    %15 = vector.broadcast %14 : vector<1x1xf32> to vector<2x1xf32>
    %16 = arith.addf %13, %15 : vector<2x1xf32>
    %c0_i32 = arith.constant 0 : i32
    %17 = vector.broadcast %c0_i32 : i32 to vector<1x4xi32>
    %18 = arith.cmpi eq, %0, %17 : vector<1x4xi32>
    %19 = arith.extui %18 : vector<1x4xi1> to vector<1x4xi32>
    %20 = arith.sitofp %19 : vector<1x4xi32> to vector<1x4xf32>
    %21 = vector.broadcast %16 : vector<2x1xf32> to vector<2x4xf32>
    %22 = vector.broadcast %20 : vector<1x4xf32> to vector<2x4xf32>
    %23 = arith.mulf %21, %22 : vector<2x4xf32>
    %24 = arith.addf %1, %23 : vector<2x4xf32>
    %c0_11 = arith.constant 0 : index
    %c128 = arith.constant 128 : index
    %25 = vector.load %arg1[%c0_11, %c128] : memref<2x512xbf16, #tpu.memory_space<vmem>>, vector<2x128xbf16>
    %c0_12 = arith.constant 0 : index
    %c0_13 = arith.constant 0 : index
    %26 = vector.load %arg2[%c0_12, %c0_13] : memref<128x16xbf16, #tpu.memory_space<vmem>>, vector<128x16xbf16>
    %cst_14 = arith.constant dense<0.000000e+00> : vector<2x16xf32>
    %27 = tpu.matmul %25, %26, %cst_14 {dimension_numbers = #tpu.dot_dimension_numbers<[1], [0], [0], [1], [0, 0, 1, 1], [], []>} : vector<2x128xbf16>, vector<128x16xbf16>, vector<2x16xf32> -> vector<2x16xf32>
    %c0_15 = arith.constant 0 : index
    %c0_16 = arith.constant 0 : index
    %28 = vector.load %arg3[%c0_15, %c0_16] : memref<1x16xf32, #tpu.memory_space<vmem>>, vector<1x16xf32>
    %29 = vector.broadcast %28 : vector<1x16xf32> to vector<2x16xf32>
    %30 = arith.addf %27, %29 : vector<2x16xf32>
    %31 = math.tanh %30 : vector<2x16xf32>
    %c0_17 = arith.constant 0 : index
    %c0_18 = arith.constant 0 : index
    %32 = vector.load %arg4[%c0_17, %c0_18] : memref<1x16xf32, #tpu.memory_space<vmem>>, vector<1x16xf32>
    %33 = vector.broadcast %32 : vector<1x16xf32> to vector<2x16xf32>
    %34 = arith.mulf %31, %33 : vector<2x16xf32>
    %cst_19 = arith.constant dense<0.000000e+00> : vector<2xf32>
    %35 = vector.multi_reduction <add>, %34, %cst_19 [1] : vector<2x16xf32> to vector<2xf32>
    %36 = vector.shape_cast %35 : vector<2xf32> to vector<2x1xf32>
    %c0_20 = arith.constant 0 : index
    %c0_21 = arith.constant 0 : index
    %37 = vector.load %arg5[%c0_20, %c0_21] : memref<1x1xf32, #tpu.memory_space<vmem>>, vector<1x1xf32>
    %38 = vector.broadcast %37 : vector<1x1xf32> to vector<2x1xf32>
    %39 = arith.addf %36, %38 : vector<2x1xf32>
    %c1_i32 = arith.constant 1 : i32
    %40 = vector.broadcast %c1_i32 : i32 to vector<1x4xi32>
    %41 = arith.cmpi eq, %0, %40 : vector<1x4xi32>
    %42 = arith.extui %41 : vector<1x4xi1> to vector<1x4xi32>
    %43 = arith.sitofp %42 : vector<1x4xi32> to vector<1x4xf32>
    %44 = vector.broadcast %39 : vector<2x1xf32> to vector<2x4xf32>
    %45 = vector.broadcast %43 : vector<1x4xf32> to vector<2x4xf32>
    %46 = arith.mulf %44, %45 : vector<2x4xf32>
    %47 = arith.addf %24, %46 : vector<2x4xf32>
    %c0_22 = arith.constant 0 : index
    %c256 = arith.constant 256 : index
    %48 = vector.load %arg1[%c0_22, %c256] : memref<2x512xbf16, #tpu.memory_space<vmem>>, vector<2x128xbf16>
    %c0_23 = arith.constant 0 : index
    %c0_24 = arith.constant 0 : index
    %49 = vector.load %arg2[%c0_23, %c0_24] : memref<128x16xbf16, #tpu.memory_space<vmem>>, vector<128x16xbf16>
    %cst_25 = arith.constant dense<0.000000e+00> : vector<2x16xf32>
    %50 = tpu.matmul %48, %49, %cst_25 {dimension_numbers = #tpu.dot_dimension_numbers<[1], [0], [0], [1], [0, 0, 1, 1], [], []>} : vector<2x128xbf16>, vector<128x16xbf16>, vector<2x16xf32> -> vector<2x16xf32>
    %c0_26 = arith.constant 0 : index
    %c0_27 = arith.constant 0 : index
    %51 = vector.load %arg3[%c0_26, %c0_27] : memref<1x16xf32, #tpu.memory_space<vmem>>, vector<1x16xf32>
    %52 = vector.broadcast %51 : vector<1x16xf32> to vector<2x16xf32>
    %53 = arith.addf %50, %52 : vector<2x16xf32>
    %54 = math.tanh %53 : vector<2x16xf32>
    %c0_28 = arith.constant 0 : index
    %c0_29 = arith.constant 0 : index
    %55 = vector.load %arg4[%c0_28, %c0_29] : memref<1x16xf32, #tpu.memory_space<vmem>>, vector<1x16xf32>
    %56 = vector.broadcast %55 : vector<1x16xf32> to vector<2x16xf32>
    %57 = arith.mulf %54, %56 : vector<2x16xf32>
    %cst_30 = arith.constant dense<0.000000e+00> : vector<2xf32>
    %58 = vector.multi_reduction <add>, %57, %cst_30 [1] : vector<2x16xf32> to vector<2xf32>
    %59 = vector.shape_cast %58 : vector<2xf32> to vector<2x1xf32>
    %c0_31 = arith.constant 0 : index
    %c0_32 = arith.constant 0 : index
    %60 = vector.load %arg5[%c0_31, %c0_32] : memref<1x1xf32, #tpu.memory_space<vmem>>, vector<1x1xf32>
    %61 = vector.broadcast %60 : vector<1x1xf32> to vector<2x1xf32>
    %62 = arith.addf %59, %61 : vector<2x1xf32>
    %c2_i32 = arith.constant 2 : i32
    %63 = vector.broadcast %c2_i32 : i32 to vector<1x4xi32>
    %64 = arith.cmpi eq, %0, %63 : vector<1x4xi32>
    %65 = arith.extui %64 : vector<1x4xi1> to vector<1x4xi32>
    %66 = arith.sitofp %65 : vector<1x4xi32> to vector<1x4xf32>
    %67 = vector.broadcast %62 : vector<2x1xf32> to vector<2x4xf32>
    %68 = vector.broadcast %66 : vector<1x4xf32> to vector<2x4xf32>
    %69 = arith.mulf %67, %68 : vector<2x4xf32>
    %70 = arith.addf %47, %69 : vector<2x4xf32>
    %c0_33 = arith.constant 0 : index
    %c384 = arith.constant 384 : index
    %71 = vector.load %arg1[%c0_33, %c384] : memref<2x512xbf16, #tpu.memory_space<vmem>>, vector<2x128xbf16>
    %c0_34 = arith.constant 0 : index
    %c0_35 = arith.constant 0 : index
    %72 = vector.load %arg2[%c0_34, %c0_35] : memref<128x16xbf16, #tpu.memory_space<vmem>>, vector<128x16xbf16>
    %cst_36 = arith.constant dense<0.000000e+00> : vector<2x16xf32>
    %73 = tpu.matmul %71, %72, %cst_36 {dimension_numbers = #tpu.dot_dimension_numbers<[1], [0], [0], [1], [0, 0, 1, 1], [], []>} : vector<2x128xbf16>, vector<128x16xbf16>, vector<2x16xf32> -> vector<2x16xf32>
    %c0_37 = arith.constant 0 : index
    %c0_38 = arith.constant 0 : index
    %74 = vector.load %arg3[%c0_37, %c0_38] : memref<1x16xf32, #tpu.memory_space<vmem>>, vector<1x16xf32>
    %75 = vector.broadcast %74 : vector<1x16xf32> to vector<2x16xf32>
    %76 = arith.addf %73, %75 : vector<2x16xf32>
    %77 = math.tanh %76 : vector<2x16xf32>
    %c0_39 = arith.constant 0 : index
    %c0_40 = arith.constant 0 : index
    %78 = vector.load %arg4[%c0_39, %c0_40] : memref<1x16xf32, #tpu.memory_space<vmem>>, vector<1x16xf32>
    %79 = vector.broadcast %78 : vector<1x16xf32> to vector<2x16xf32>
    %80 = arith.mulf %77, %79 : vector<2x16xf32>
    %cst_41 = arith.constant dense<0.000000e+00> : vector<2xf32>
    %81 = vector.multi_reduction <add>, %80, %cst_41 [1] : vector<2x16xf32> to vector<2xf32>
    %82 = vector.shape_cast %81 : vector<2xf32> to vector<2x1xf32>
    %c0_42 = arith.constant 0 : index
    %c0_43 = arith.constant 0 : index
    %83 = vector.load %arg5[%c0_42, %c0_43] : memref<1x1xf32, #tpu.memory_space<vmem>>, vector<1x1xf32>
    %84 = vector.broadcast %83 : vector<1x1xf32> to vector<2x1xf32>
    %85 = arith.addf %82, %84 : vector<2x1xf32>
    %c3_i32 = arith.constant 3 : i32
    %86 = vector.broadcast %c3_i32 : i32 to vector<1x4xi32>
    %87 = arith.cmpi eq, %0, %86 : vector<1x4xi32>
    %88 = arith.extui %87 : vector<1x4xi1> to vector<1x4xi32>
    %89 = arith.sitofp %88 : vector<1x4xi32> to vector<1x4xf32>
    %90 = vector.broadcast %85 : vector<2x1xf32> to vector<2x4xf32>
    %91 = vector.broadcast %89 : vector<1x4xf32> to vector<2x4xf32>
    %92 = arith.mulf %90, %91 : vector<2x4xf32>
    %93 = arith.addf %70, %92 : vector<2x4xf32>
    %c0_44 = arith.constant 0 : index
    %c0_45 = arith.constant 0 : index
    %94 = vector.load %arg7[%c0_44, %c0_45] : memref<2x4xf32, #tpu.memory_space<vmem>>, vector<2x4xf32>
    tpu.vector_store %arg7[%c0_44, %c0_45], %93 {strides = array<i32>} : memref<2x4xf32, #tpu.memory_space<vmem>>, vector<2x4xf32>,
    %cst_46 = arith.constant dense<0xFF800000> : vector<2xf32>
    %95 = vector.multi_reduction <maximumf>, %93, %cst_46 [1] : vector<2x4xf32> to vector<2xf32>
    %96 = vector.shape_cast %95 : vector<2xf32> to vector<2x1xf32>
    %97 = vector.broadcast %96 : vector<2x1xf32> to vector<2x4xf32>
    %98 = arith.subf %93, %97 : vector<2x4xf32>
    %99 = math.exp %98 : vector<2x4xf32>
    %cst_47 = arith.constant dense<0.000000e+00> : vector<2xf32>
    %100 = vector.multi_reduction <add>, %99, %cst_47 [1] : vector<2x4xf32> to vector<2xf32>
    %101 = vector.shape_cast %100 : vector<2xf32> to vector<2x1xf32>
    %102 = math.log %101 : vector<2x1xf32>
    %103 = arith.addf %96, %102 : vector<2x1xf32>
    %c0_48 = arith.constant 0 : index
    %c0_49 = arith.constant 0 : index
    %104 = vector.load %arg6[%c0_48, %c0_49] : memref<2x1xi32, #tpu.memory_space<vmem>>, vector<2x1xi32>
    %105 = vector.broadcast %0 : vector<1x4xi32> to vector<2x4xi32>
    %106 = vector.broadcast %104 : vector<2x1xi32> to vector<2x4xi32>
    %107 = arith.cmpi eq, %105, %106 : vector<2x4xi32>
    %108 = arith.extui %107 : vector<2x4xi1> to vector<2x4xi32>
    %109 = arith.sitofp %108 : vector<2x4xi32> to vector<2x4xf32>
    %110 = arith.mulf %93, %109 : vector<2x4xf32>
    %cst_50 = arith.constant dense<0.000000e+00> : vector<2xf32>
    %111 = vector.multi_reduction <add>, %110, %cst_50 [1] : vector<2x4xf32> to vector<2xf32>
    %112 = vector.shape_cast %111 : vector<2xf32> to vector<2x1xf32>
    %113 = arith.subf %103, %112 : vector<2x1xf32>
    %c0_51 = arith.constant 0 : index
    %c0_52 = arith.constant 0 : index
    %114 = vector.load %arg8[%c0_51, %c0_52] : memref<2x1xf32, #tpu.memory_space<vmem>>, vector<2x1xf32>
    tpu.vector_store %arg8[%c0_51, %c0_52], %113 {strides = array<i32>} : memref<2x1xf32, #tpu.memory_space<vmem>>, vector<2x1xf32>,
    return
  }
  func.func @transform_0(%arg0: i32) -> (i32, i32) {
    %c0_i32 = arith.constant 0 : i32
    %c0_i32_0 = arith.constant 0 : i32
    return %arg0, %c0_i32 : i32, i32
  }
  func.func @transform_1(%arg0: i32) -> (i32, i32) {
    %c0_i32 = arith.constant 0 : i32
    %c0_i32_0 = arith.constant 0 : i32
    %c0_i32_1 = arith.constant 0 : i32
    return %c0_i32, %c0_i32_0 : i32, i32
  }
  func.func @transform_2(%arg0: i32) -> (i32, i32) {
    %c0_i32 = arith.constant 0 : i32
    %c0_i32_0 = arith.constant 0 : i32
    %c0_i32_1 = arith.constant 0 : i32
    return %c0_i32, %c0_i32_0 : i32, i32
  }
  func.func @transform_3(%arg0: i32) -> (i32, i32) {
    %c0_i32 = arith.constant 0 : i32
    %c0_i32_0 = arith.constant 0 : i32
    %c0_i32_1 = arith.constant 0 : i32
    return %c0_i32, %c0_i32_0 : i32, i32
  }
  func.func @transform_4(%arg0: i32) -> (i32, i32) {
    %c0_i32 = arith.constant 0 : i32
    %c0_i32_0 = arith.constant 0 : i32
    %c0_i32_1 = arith.constant 0 : i32
    return %c0_i32, %c0_i32_0 : i32, i32
  }
  func.func @transform_5(%arg0: i32) -> (i32, i32) {
    %c0_i32 = arith.constant 0 : i32
    %c0_i32_0 = arith.constant 0 : i32
    return %arg0, %c0_i32 : i32, i32
  }
  func.func @transform_6(%arg0: i32) -> (i32, i32) {
    %c0_i32 = arith.constant 0 : i32
    %c0_i32_0 = arith.constant 0 : i32
    return %arg0, %c0_i32 : i32, i32
  }
  func.func @transform_7(%arg0: i32) -> (i32, i32) {
    %c0_i32 = arith.constant 0 : i32
    %c0_i32_0 = arith.constant 0 : i32
    return %arg0, %c0_i32 : i32, i32
  }
}

</mosaic_0001>

<llo_original>
// kernel: tpu_custom_call.1
$region0: #{tpu_custom_call.1}
  #allocation0 [shape = 'u32[]', space=smem, size = 0x4, offset = 0x4, fixed_abs, tag = 'smem constant byte address 0x4 - core index']
  #allocation1 [shape = 'u32[144,128]{1,0:T(1,128)}', space=vmem, size = 0x12000, scoped, tag = 'internal scratch']
  #allocation2 [shape = 'f32[1,1]{1,0:T(1,128)S(1)}', space=vmem, size = 0x200, scoped, tag = 'scoped memory for tpu_custom_call.1']
  %s0 = inlined_call_operand.vmem [shape: bf16[2,512], index: 0, kind: input, shape index: {}]
  %s1 = inlined_call_operand.vmem [shape: bf16[128,16], index: 1, kind: input, shape index: {}]
  %s2 = inlined_call_operand.vmem [shape: f32[1,16], index: 2, kind: input, shape index: {}]
  %s3 = inlined_call_operand.vmem [shape: f32[1,16], index: 3, kind: input, shape index: {}]
  %s4 = inlined_call_operand.<no memory space> [shape: f32[1,1], index: 4, kind: input, shape index: {}]
  %s5 = inlined_call_operand.vmem [shape: s32[2,1], index: 5, kind: input, shape index: {}]
  %s6 = inlined_call_operand.hbm [shape: f32[2,4], index: 6, kind: output, shape index: {0}]
  %s7 = inlined_call_operand.vmem [shape: f32[2,1], index: 7, kind: output, shape index: {1}]
  %8 = xla_tuple %s6, %s7
  %s9 = sld [smem:[#allocation0]]
  $region42: #{tpu_custom_call.1} parent=0
    _
  %s11 = ssub.s32 1, %s9
  %s12 = scalar_select 0, %s11, %s9
  %v13 = vstv %s4
  %14 = vst [vmem:[#allocation2] sm:$0x1] %v13
  $region1: #{tpu_custom_call.1} parent=0
    #allocation3 [shape = 'u8[1024]{0}', space=vmem, size = 0x400, scoped, tag = 'output window, operand 0, single buffered']
    #allocation4 [shape = 's32[1]{0}', space=sflag, size = 0x4, scoped, tag = 'scoped memory for tpu_custom_call.1']
    %15 = vsyncpa [#allocation4], 0
    // Predicated region
    $region2: #{tpu_custom_call.1} parent=1 // pred_check
      _
    $region3: #{tpu_custom_call.1} parent=1 // pred_check_branch
      %17 = sbr.rel (0) target = $region5
    $region4: #{tpu_custom_call.1} parent=1 // pred_region
      _
    $region5: #{tpu_custom_call.1} parent=1 // pred_fallthru
      _
    // Predicated region
    $region6: #{tpu_custom_call.1} parent=1 // pred_check
      _
    $region7: #{tpu_custom_call.1} parent=1 // pred_check_branch
      %19 = sbr.rel (0) target = $region9
    $region8: #{tpu_custom_call.1} parent=1 // pred_region
      _
    $region9: #{tpu_custom_call.1} parent=1 // pred_fallthru
      _
    // Predicated region
    $region10: #{tpu_custom_call.1} parent=1 // pred_check
      _
    $region11: #{tpu_custom_call.1} parent=1 // pred_check_branch
      %21 = sbr.rel (0) target = $region13
    $region12: #{tpu_custom_call.1} parent=1 // pred_region
      _
    $region13: #{tpu_custom_call.1} parent=1 // pred_fallthru
      _
    // Predicated region
    $region14: #{tpu_custom_call.1} parent=1 // pred_check
      _
    $region15: #{tpu_custom_call.1} parent=1 // pred_check_branch
      %23 = sbr.rel (0) target = $region17
    $region16: #{tpu_custom_call.1} parent=1 // pred_region
      _
    $region17: #{tpu_custom_call.1} parent=1 // pred_fallthru
      _
    // Predicated region
    $region18: #{tpu_custom_call.1} parent=1 // pred_check
      _
    $region19: #{tpu_custom_call.1} parent=1 // pred_check_branch
      %25 = sbr.rel (0) target = $region21
    $region20: #{tpu_custom_call.1} parent=1 // pred_region
      _
    $region21: #{tpu_custom_call.1} parent=1 // pred_fallthru
      _
    // Predicated region
    $region22: #{tpu_custom_call.1} parent=1 // pred_check
      _
    $region23: #{tpu_custom_call.1} parent=1 // pred_check_branch
      %27 = sbr.rel (0) target = $region25
    $region24: #{tpu_custom_call.1} parent=1 // pred_region
      _
    $region25: #{tpu_custom_call.1} parent=1 // pred_fallthru
      _
    %v29 = vlaneseq
    %v30 = vand.u32 %v29, 127
    %v31 = vld [vmem:[%s0] sm:$0x1]
    %v32 = vld [vmem:[%s1] sm:$0xf]
    %v33 = vld [vmem:[%s1 + $0x4] sm:$0xf]
    %v34 = vld [vmem:[%s1 + $0x8] sm:$0xf]
    %v35 = vld [vmem:[%s1 + $0xc] sm:$0xf]
    %v36 = vld [vmem:[%s1 + $0x10] sm:$0xf]
    %v37 = vld [vmem:[%s1 + $0x14] sm:$0xf]
    %v38 = vld [vmem:[%s1 + $0x18] sm:$0xf]
    %v39 = vld [vmem:[%s1 + $0x1c] sm:$0xf]
    %v40 = vld [vmem:[%s1 + $0x20] sm:$0xf]
    %v41 = vld [vmem:[%s1 + $0x24] sm:$0xf]
    %v42 = vld [vmem:[%s1 + $0x28] sm:$0xf]
    %v43 = vld [vmem:[%s1 + $0x2c] sm:$0xf]
    %v44 = vld [vmem:[%s1 + $0x30] sm:$0xf]
    %v45 = vld [vmem:[%s1 + $0x34] sm:$0xf]
    %v46 = vld [vmem:[%s1 + $0x38] sm:$0xf]
    %v47 = vld [vmem:[%s1 + $0x3c] sm:$0xf]
    %v48 = vld [vmem:[%s2] sm:$0x1]
    %v50 = vlaneseq
    %v51 = vshrl.u32 %v50, 7
    %v52 = vsub.s32 0, %v51
    %v53 = vrot.slane %v48, %v52
    %v71 = vunpack.c.l.b16 %v32
    %v72 = vunpack.c.l.b16 %v33
    %v73 = vunpack.c.l.b16 %v34
    %v74 = vunpack.c.l.b16 %v35
    %v75 = vunpack.c.l.b16 %v36
    %v76 = vunpack.c.l.b16 %v37
    %v77 = vunpack.c.l.b16 %v38
    %v78 = vunpack.c.l.b16 %v39
    %v79 = vunpack.c.l.b16 %v40
    %v80 = vunpack.c.l.b16 %v41
    %v81 = vunpack.c.l.b16 %v42
    %v82 = vunpack.c.l.b16 %v43
    %v83 = vunpack.c.l.b16 %v44
    %v84 = vunpack.c.l.b16 %v45
    %v85 = vunpack.c.l.b16 %v46
    %v86 = vunpack.c.l.b16 %v47
    %v87 = vpack.c.b16 %v72, %v71
    %v88 = vpack.c.b16 %v74, %v73
    %v89 = vpack.c.b16 %v76, %v75
    %v90 = vpack.c.b16 %v78, %v77
    %v91 = vpack.c.b16 %v80, %v79
    %v92 = vpack.c.b16 %v82, %v81
    %v93 = vpack.c.b16 %v84, %v83
    %v94 = vpack.c.b16 %v86, %v85
    %103 = vmatprep.subr.bf16.mxu0 0
    %104 = vmatpush1.bf16.msra.mxu0 %v94
    %105 = vmatprep.subr.bf16.mxu0 0
    %106 = vmatpush1.bf16.msra.mxu0 %v93
    %107 = vmatprep.subr.bf16.mxu0 0
    %108 = vmatpush1.bf16.msra.mxu0 %v92
    %109 = vmatprep.subr.bf16.mxu0 0
    %110 = vmatpush1.bf16.msra.mxu0 %v91
    %111 = vmatprep.subr.bf16.mxu0 0
    %112 = vmatpush1.bf16.msra.mxu0 %v90
    %113 = vmatprep.subr.bf16.mxu0 0
    %114 = vmatpush1.bf16.msra.mxu0 %v89
    %115 = vmatprep.subr.bf16.mxu0 0
    %116 = vmatpush1.bf16.msra.mxu0 %v88
    %117 = vmatprep.subr.bf16.mxu0 0
    %118 = vmatpush1.bf16.msra.mxu0 %v87
    %119 = vmatprep.subr.bf16.mxu0 0
    %120 = vmatpush2.bf16.msra.mxu0 0
    %121 = vmatprep.subr.bf16.mxu0 0
    %122 = vmatpush2.bf16.msra.mxu0 0
    %123 = vmatprep.subr.bf16.mxu0 0
    %124 = vmatpush2.bf16.msra.mxu0 0
    %125 = vmatprep.subr.bf16.mxu0 0
    %126 = vmatpush2.bf16.msra.mxu0 0
    %127 = vmatprep.subr.bf16.mxu0 0
    %128 = vmatpush2.bf16.msra.mxu0 0
    %129 = vmatprep.subr.bf16.mxu0 0
    %130 = vmatpush2.bf16.msra.mxu0 0
    %131 = vmatprep.subr.bf16.mxu0 0
    %132 = vmatpush2.bf16.msra.mxu0 0
    %133 = vmatprep.subr.bf16.mxu0 0
    %134 = vmatpush2.bf16.msra.mxu0 0
    %135 = vmatprep.mubr.bf16.mxu0 0
    %136 = vmatmul.mubr.bf16.gmra.mxu0 %v31
    %v137 = vpop.f32.mrf.mxu0
    %v138 = vadd.f32 %v53, %v137
    %v139 = vpop.f32.mrf.mxu0
    %v140 = vpop.f32.mrf.mxu0
    %v141 = vpop.f32.mrf.mxu0
    %142 = vdwg.mxu0
    %v143 = vtanh.pop %v138
    %v144 = vld [vmem:[%s3] sm:$0x1]
    %v146 = vlaneseq
    %v147 = vshrl.u32 %v146, 7
    %v148 = vsub.s32 0, %v147
    %v149 = vrot.slane %v144, %v148
    %v151 = vmul.f32 %v143, %v149
    %vm152 = vcmask 123904
    %v153 = vsel %vm152, %v151, 0.0
    %154 = vadd.xlane.f32.xlu0 %v153
    %v155 = vpop.xlane.xlu0 %154
    %v156 = vld [vmem:[#allocation2] sm:$0x1]
    %v158 = vlaneseq
    %v159 = vshrl.u32 %v158, 7
    %v160 = vsub.s32 0, %v159
    %v161 = vrot.slane %v156, %v160
    %v163 = vadd.f32 %v155, %v161
    %vm164 = vcmp.eq.s32.totalorder %v30, 0
    %v165 = vsel %vm164, 1, 0
    %v166 = vcvt.s32.f32 %v165
    %168 = vset.pattern.permute.xlu0 0
    %169 = vperm.xlu0 %168, %v163
    %v170 = vpop.permute.xlu0 %169
    %v172 = vmul.f32 %v170, %v166
    %v173 = vadd.f32 %v172, 0.0
    %v174 = vld [vmem:[%s0 + $0x1] sm:$0x1]
    %175 = vmatprep.subr.bf16.mxu0 0
    %176 = vmatpush1.bf16.msra.mxu0 %v94
    %177 = vmatprep.subr.bf16.mxu0 0
    %178 = vmatpush1.bf16.msra.mxu0 %v93
    %179 = vmatprep.subr.bf16.mxu0 0
    %180 = vmatpush1.bf16.msra.mxu0 %v92
    %181 = vmatprep.subr.bf16.mxu0 0
    %182 = vmatpush1.bf16.msra.mxu0 %v91
    %183 = vmatprep.subr.bf16.mxu0 0
    %184 = vmatpush1.bf16.msra.mxu0 %v90
    %185 = vmatprep.subr.bf16.mxu0 0
    %186 = vmatpush1.bf16.msra.mxu0 %v89
    %187 = vmatprep.subr.bf16.mxu0 0
    %188 = vmatpush1.bf16.msra.mxu0 %v88
    %189 = vmatprep.subr.bf16.mxu0 0
    %190 = vmatpush1.bf16.msra.mxu0 %v87
    %191 = vmatprep.subr.bf16.mxu0 0
    %192 = vmatpush2.bf16.msra.mxu0 0
    %193 = vmatprep.subr.bf16.mxu0 0
    %194 = vmatpush2.bf16.msra.mxu0 0
    %195 = vmatprep.subr.bf16.mxu0 0
    %196 = vmatpush2.bf16.msra.mxu0 0
    %197 = vmatprep.subr.bf16.mxu0 0
    %198 = vmatpush2.bf16.msra.mxu0 0
    %199 = vmatprep.subr.bf16.mxu0 0
    %200 = vmatpush2.bf16.msra.mxu0 0
    %201 = vmatprep.subr.bf16.mxu0 0
    %202 = vmatpush2.bf16.msra.mxu0 0
    %203 = vmatprep.subr.bf16.mxu0 0
    %204 = vmatpush2.bf16.msra.mxu0 0
    %205 = vmatprep.subr.bf16.mxu0 0
    %206 = vmatpush2.bf16.msra.mxu0 0
    %207 = vmatprep.mubr.bf16.mxu0 0
    %208 = vmatmul.mubr.bf16.gmra.mxu0 %v174
    %v209 = vpop.f32.mrf.mxu0
    %v210 = vadd.f32 %v53, %v209
    %v211 = vpop.f32.mrf.mxu0
    %v212 = vpop.f32.mrf.mxu0
    %v213 = vpop.f32.mrf.mxu0
    %214 = vdwg.mxu0
    %v215 = vtanh.pop %v210
    %v216 = vmul.f32 %v215, %v149
    %v217 = vsel %vm152, %v216, 0.0
    %218 = vadd.xlane.f32.xlu0 %v217
    %v219 = vpop.xlane.xlu0 %218
    %v220 = vadd.f32 %v219, %v161
    %vm221 = vcmp.eq.s32.totalorder %v30, 1
    %v222 = vsel %vm221, 1, 0
    %v223 = vcvt.s32.f32 %v222
    %225 = vset.pattern.permute.xlu0 0
    %226 = vperm.xlu0 %225, %v220
    %v227 = vpop.permute.xlu0 %226
    %v229 = vmul.f32 %v227, %v223
    %v230 = vadd.f32 %v173, %v229
    %v231 = vld [vmem:[%s0 + $0x2] sm:$0x1]
    %232 = vmatprep.subr.bf16.mxu0 0
    %233 = vmatpush1.bf16.msra.mxu0 %v94
    %234 = vmatprep.subr.bf16.mxu0 0
    %235 = vmatpush1.bf16.msra.mxu0 %v93
    %236 = vmatprep.subr.bf16.mxu0 0
    %237 = vmatpush1.bf16.msra.mxu0 %v92
    %238 = vmatprep.subr.bf16.mxu0 0
    %239 = vmatpush1.bf16.msra.mxu0 %v91
    %240 = vmatprep.subr.bf16.mxu0 0
    %241 = vmatpush1.bf16.msra.mxu0 %v90
    %242 = vmatprep.subr.bf16.mxu0 0
    %243 = vmatpush1.bf16.msra.mxu0 %v89
    %244 = vmatprep.subr.bf16.mxu0 0
    %245 = vmatpush1.bf16.msra.mxu0 %v88
    %246 = vmatprep.subr.bf16.mxu0 0
    %247 = vmatpush1.bf16.msra.mxu0 %v87
    %248 = vmatprep.subr.bf16.mxu0 0
    %249 = vmatpush2.bf16.msra.mxu0 0
    %250 = vmatprep.subr.bf16.mxu0 0
    %251 = vmatpush2.bf16.msra.mxu0 0
    %252 = vmatprep.subr.bf16.mxu0 0
    %253 = vmatpush2.bf16.msra.mxu0 0
    %254 = vmatprep.subr.bf16.mxu0 0
    %255 = vmatpush2.bf16.msra.mxu0 0
    %256 = vmatprep.subr.bf16.mxu0 0
    %257 = vmatpush2.bf16.msra.mxu0 0
    %258 = vmatprep.subr.bf16.mxu0 0
    %259 = vmatpush2.bf16.msra.mxu0 0
    %260 = vmatprep.subr.bf16.mxu0 0
    %261 = vmatpush2.bf16.msra.mxu0 0
    %262 = vmatprep.subr.bf16.mxu0 0
    %263 = vmatpush2.bf16.msra.mxu0 0
    %264 = vmatprep.mubr.bf16.mxu0 0
    %265 = vmatmul.mubr.bf16.gmra.mxu0 %v231
    %v266 = vpop.f32.mrf.mxu0
    %v267 = vadd.f32 %v53, %v266
    %v268 = vpop.f32.mrf.mxu0
    %v269 = vpop.f32.mrf.mxu0
    %v270 = vpop.f32.mrf.mxu0
    %271 = vdwg.mxu0
    %v272 = vtanh.pop %v267
    %v273 = vmul.f32 %v272, %v149
    %v274 = vsel %vm152, %v273, 0.0
    %275 = vadd.xlane.f32.xlu0 %v274
    %v276 = vpop.xlane.xlu0 %275
    %v277 = vadd.f32 %v276, %v161
    %vm278 = vcmp.eq.s32.totalorder %v30, 2
    %v279 = vsel %vm278, 1, 0
    %v280 = vcvt.s32.f32 %v279
    %282 = vset.pattern.permute.xlu0 0
    %283 = vperm.xlu0 %282, %v277
    %v284 = vpop.permute.xlu0 %283
    %v286 = vmul.f32 %v284, %v280
    %v287 = vadd.f32 %v230, %v286
    %v288 = vld [vmem:[%s0 + $0x3] sm:$0x1]
    %289 = vmatprep.subr.bf16.mxu0 0
    %290 = vmatpush1.bf16.msra.mxu0 %v94
    %291 = vmatprep.subr.bf16.mxu0 0
    %292 = vmatpush1.bf16.msra.mxu0 %v93
    %293 = vmatprep.subr.bf16.mxu0 0
    %294 = vmatpush1.bf16.msra.mxu0 %v92
    %295 = vmatprep.subr.bf16.mxu0 0
    %296 = vmatpush1.bf16.msra.mxu0 %v91
    %297 = vmatprep.subr.bf16.mxu0 0
    %298 = vmatpush1.bf16.msra.mxu0 %v90
    %299 = vmatprep.subr.bf16.mxu0 0
    %300 = vmatpush1.bf16.msra.mxu0 %v89
    %301 = vmatprep.subr.bf16.mxu0 0
    %302 = vmatpush1.bf16.msra.mxu0 %v88
    %303 = vmatprep.subr.bf16.mxu0 0
    %304 = vmatpush1.bf16.msra.mxu0 %v87
    %305 = vmatprep.subr.bf16.mxu0 0
    %306 = vmatpush2.bf16.msra.mxu0 0
    %307 = vmatprep.subr.bf16.mxu0 0
    %308 = vmatpush2.bf16.msra.mxu0 0
    %309 = vmatprep.subr.bf16.mxu0 0
    %310 = vmatpush2.bf16.msra.mxu0 0
    %311 = vmatprep.subr.bf16.mxu0 0
    %312 = vmatpush2.bf16.msra.mxu0 0
    %313 = vmatprep.subr.bf16.mxu0 0
    %314 = vmatpush2.bf16.msra.mxu0 0
    %315 = vmatprep.subr.bf16.mxu0 0
    %316 = vmatpush2.bf16.msra.mxu0 0
    %317 = vmatprep.subr.bf16.mxu0 0
    %318 = vmatpush2.bf16.msra.mxu0 0
    %319 = vmatprep.subr.bf16.mxu0 0
    %320 = vmatpush2.bf16.msra.mxu0 0
    %321 = vmatprep.mubr.bf16.mxu0 0
    %322 = vmatmul.mubr.bf16.gmra.mxu0 %v288
    %v323 = vpop.f32.mrf.mxu0
    %v324 = vadd.f32 %v53, %v323
    %v325 = vpop.f32.mrf.mxu0
    %v326 = vpop.f32.mrf.mxu0
    %v327 = vpop.f32.mrf.mxu0
    %328 = vdwg.mxu0
    %v329 = vtanh.pop %v324
    %v330 = vmul.f32 %v329, %v149
    %v331 = vsel %vm152, %v330, 0.0
    %332 = vadd.xlane.f32.xlu0 %v331
    %v333 = vpop.xlane.xlu0 %332
    %v334 = vadd.f32 %v333, %v161
    %vm335 = vcmp.eq.s32.totalorder %v30, 3
    %v336 = vsel %vm335, 1, 0
    %v337 = vcvt.s32.f32 %v336
    %339 = vset.pattern.permute.xlu0 0
    %340 = vperm.xlu0 %339, %v334
    %v341 = vpop.permute.xlu0 %340
    %v343 = vmul.f32 %v341, %v337
    %v344 = vadd.f32 %v287, %v343
    %vm345 = vcmask 25600
    %346 = vst.msk [vmem:[#allocation3] sm:$0x3] %vm345, %v344
    %v347 = vsel %vm345, %v344, -inf
    %348 = vmax.xlane.f32.xlu0 %v347
    %v349 = vpop.xlane.xlu0 %348
    %v350 = vsub.f32 %v344, %v349
    %v351 = vmul.f32 %v350, 1.442695
    %v352 = vpow.pop %v351
    %v353 = vsel %vm345, %v352, 0.0
    %354 = vadd.xlane.f32.xlu0 %v353
    %v355 = vpop.xlane.xlu0 %354
    %v356 = vlog2.pop %v355
    %v357 = vmul.f32 %v356, 0.6931472
    %v358 = vadd.f32 %v349, %v357
    %v359 = vld [vmem:[%s5] sm:$0x3]
    %360 = vset.pattern.permute.xlu0 0
    %361 = vperm.xlu0 %360, %v359
    %v362 = vpop.permute.xlu0 %361
    %vm363 = vcmp.eq.s32.totalorder %v30, %v362
    %v364 = vsel %vm363, 1, 0
    %v365 = vcvt.s32.f32 %v364
    %v366 = vmul.f32 %v344, %v365
    %v367 = vsel %vm345, %v366, 0.0
    %368 = vadd.xlane.f32.xlu0 %v367
    %v369 = vpop.xlane.xlu0 %368
    %v370 = vsub.f32 %v358, %v369
    %vm371 = vcmask 1024
    %372 = vst.msk [vmem:[%s7] sm:$0x3] %vm371, %v370
    // Predicated region
    $region26: #{tpu_custom_call.1} parent=1 // pred_check
      _
    $region27: #{tpu_custom_call.1} parent=1 // pred_check_branch
      %374 = sbr.rel (0) target = $region29
    $region28: #{tpu_custom_call.1} parent=1 // pred_region
      %s376 = ssub.s32 32, 32
      %377 = vsyncadd [#allocation4], %s376
      %s379 = sshll.u32 [#allocation3], 4
      %s380 = int_to_ptr.vmem [resolvable:$true] %s379
      %382 = dma.vmem_to_hbm [thread:$0]  %s380, 32, %s6, [#allocation4]
    $region29: #{tpu_custom_call.1} parent=1 // pred_fallthru
      _
    // Predicated region
    $region30: #{tpu_custom_call.1} parent=1 // pred_check
      _
    $region31: #{tpu_custom_call.1} parent=1 // pred_check_branch
      %384 = sbr.rel (0) target = $region33
    $region32: #{tpu_custom_call.1} parent=1 // pred_region
      _
    $region33: #{tpu_custom_call.1} parent=1 // pred_fallthru
      _
    // Predicated region
    $region34: #{tpu_custom_call.1} parent=1 // pred_check
      _
    $region35: #{tpu_custom_call.1} parent=1 // pred_check_branch
      %386 = sbr.rel (0) target = $region37
    $region36: #{tpu_custom_call.1} parent=1 // pred_region
      %387 = dma.done [#allocation4], 32
    $region37: #{tpu_custom_call.1} parent=1 // pred_fallthru
      _
    // Predicated region
    $region38: #{tpu_custom_call.1} parent=1 // pred_check
      _
    $region39: #{tpu_custom_call.1} parent=1 // pred_check_branch
      %389 = sbr.rel (0) target = $region41
    $region40: #{tpu_custom_call.1} parent=1 // pred_region
      _
    $region41: #{tpu_custom_call.1} parent=1 // pred_fallthru
      _
    %390 = vsyncpa [#allocation4], 1

</llo_original>
